<compile_context>
chip_gen: v7x
topology: tpu7x:2x2x1
jax: 0.10.0
libtpu: 0.0.40
codegen_flags: <defaults>
</compile_context>

<pallas_src>
import math

import jax
import jax.numpy as jnp
from jax.experimental import pallas as pl
from jax.experimental.pallas import tpu as pltpu


def _round_up(x, m):
    return ((x + m - 1) // m) * m


# -----------------------------------------------------------------------------
# Kernels
# -----------------------------------------------------------------------------
def _gcn_fused_kernel(x_ref, adj_ref, w_ref, b_ref, o_ref):
    """Per-batch fused step: seq = x @ w + b ; out = adj @ seq.

    x_ref:   (N, Cin)  node features for batch b (compute dtype)
    adj_ref: (N, N)    adjacency for batch b (compute dtype)
    w_ref:   (Cin, Cp) pre-transposed Conv1d(k=1) weight (compute dtype)
    b_ref:   (1, Cp)   bias (f32, added to the f32 accumulator)
    o_ref:   (N, Cp)   output for batch b
    """
    seq = jnp.dot(x_ref[...], w_ref[...], preferred_element_type=jnp.float32)
    seq = (seq + b_ref[...]).astype(adj_ref.dtype)
    o_ref[...] = jnp.dot(
        adj_ref[...], seq, preferred_element_type=jnp.float32
    ).astype(o_ref.dtype)


def _linear_kernel(x_ref, w_ref, b_ref, o_ref):
    """Row-tiled per-node linear (Conv1d k=1): o = x @ w + b (hoisted seq_fts)."""
    o_ref[...] = (
        jnp.dot(x_ref[...], w_ref[...], preferred_element_type=jnp.float32)
        + b_ref[...]
    ).astype(o_ref.dtype)


def _agg_tiled_inplace_kernel(adj_ref, seq_ref, o_ref):
    """adj_tile @ seq_tile accumulated directly into the f32 output block
    (output index map is constant across k, so the block stays VMEM-resident)."""
    k = pl.program_id(2)

    @pl.when(k == 0)
    def _init():
        o_ref[...] = jnp.zeros_like(o_ref)

    o_ref[...] += jnp.dot(
        adj_ref[...], seq_ref[...], preferred_element_type=jnp.float32
    )


def _agg_tiled_scratch_kernel(adj_ref, seq_ref, o_ref, acc_ref):
    """Same as above but with an f32 scratch accumulator for narrow out dtypes."""
    k = pl.program_id(2)

    @pl.when(k == 0)
    def _init():
        acc_ref[...] = jnp.zeros_like(acc_ref)

    acc_ref[...] += jnp.dot(
        adj_ref[...], seq_ref[...], preferred_element_type=jnp.float32
    )

    @pl.when(k == pl.num_programs(2) - 1)
    def _fin():
        o_ref[...] = acc_ref[...].astype(o_ref.dtype)


# -----------------------------------------------------------------------------
# Wrapper helpers
# -----------------------------------------------------------------------------
def _vmem_limit(requested=None):
    """Generation-aware scoped-VMEM limit (v7x: 64 MiB physical; v5e/v6e: 128)."""
    if requested is not None:
        return int(requested)
    cap = 64 * 1024 * 1024  # conservative default (v7x per-TC VMEM)
    try:
        info = pltpu.get_tpu_info()
        cap = int(getattr(info, "vmem_capacity_bytes", cap) or cap)
    except Exception:
        pass
    # Leave headroom for Mosaic internal scratch; ~48 MiB on v7x, ~112 MiB on v5e/v6e.
    return int(max(min(cap - 16 * 1024 * 1024, 112 * 1024 * 1024),
                   32 * 1024 * 1024))


_TM_CANDIDATES = (1024, 512, 256, 128, 64, 32, 16, 8)


def _pick_tiles(Np, Cp, adj_i, seq_i, out_i, budget):
    """Prefer big tiles (amortize ~0.35us/step overhead); budget against VMEM."""
    for tm in _TM_CANDIDATES:
        if Np % tm:
            continue
        for tk in (Np, 2048, 1024, 512, 256, 128):
            if Np % tk or (tk % 128 and tk != Np):
                continue
            step = 2 * (tm * tk * adj_i + tk * Cp * seq_i + tm * Cp * out_i)
            if step <= budget:
                return tm, tk
    return 8, Np


def _gcn_fused_call(x, adj, w_t, b2, Cp, out_dtype, cost, vmem_limit_bytes):
    B, N, Cin = x.shape
    return pl.pallas_call(
        _gcn_fused_kernel,
        out_shape=jax.ShapeDtypeStruct((B, N, Cp), out_dtype),
        grid_spec=pltpu.PrefetchScalarGridSpec(
            num_scalar_prefetch=0,
            grid=(B,),
            in_specs=[
                pl.BlockSpec((pl.Squeezed(), N, Cin), lambda b: (b, 0, 0)),
                pl.BlockSpec((pl.Squeezed(), N, N), lambda b: (b, 0, 0)),
                pl.BlockSpec((Cin, Cp), lambda b: (0, 0)),
                pl.BlockSpec((1, Cp), lambda b: (0, 0)),
            ],
            out_specs=pl.BlockSpec((pl.Squeezed(), N, Cp), lambda b: (b, 0, 0)),
        ),
        compiler_params=pltpu.CompilerParams(
            dimension_semantics=("parallel",),
            vmem_limit_bytes=vmem_limit_bytes,
        ),
        cost_estimate=cost,
    )(x, adj, w_t, b2)


# -----------------------------------------------------------------------------
# Public entry point
# -----------------------------------------------------------------------------
def gcn_forward(x, adj, weight, bias, *, compute_dtype=None, tile=None,
                vmem_limit_bytes=None):
    """out[b] = adj[b] @ (x[b] @ weight.T + bias).

    x: (B, N, C_in), adj: (B, N, N), weight: (C_out, C_in), bias: (C_out,).
    compute_dtype: MXU operand dtype (e.g. jnp.bfloat16 on v6e/v7x). Operands are
      cast in the wrapper (HBM traffic already narrow); accumulation stays f32.
    tile: optional (row_tile, k_tile) forcing the tiled (large-N) path.
    """
    B, N, Cin = x.shape
    Cout = weight.shape[0]
    cdt = jnp.dtype(compute_dtype) if compute_dtype is not None else x.dtype
    out_dtype = x.dtype
    vmem_lim = _vmem_limit(vmem_limit_bytes)

    # Lane-dense (unmasked-vst) output padding only pays when adjacency traffic
    # dominates the extra N*(Cp-Cout) output writes; for small Cout-dominated
    # shapes write Cout directly (avoids an extra wrapper slice pass too).
    Cp_full = _round_up(Cout, 128)
    pad_lanes = (Cout % 128 != 0) and (N >= 4 * Cp_full)
    Cp = Cp_full if pad_lanes else Cout

    # Wrapper-side operand prep: weight pre-transposed to (Cin, Cp); all MXU
    # operands cast to the compute dtype BEFORE the pallas_call; bias stays f32.
    w_t = jnp.transpose(weight)
    if Cp != Cout:
        w_t = jnp.pad(w_t, ((0, 0), (0, Cp - Cout)))
        bias_p = jnp.pad(bias, (0, Cp - Cout))
    else:
        bias_p = bias
    w_t = w_t.astype(cdt)
    b2 = bias_p.reshape(1, Cp).astype(jnp.float32)
    x_c = x.astype(cdt)
    adj_c = adj.astype(cdt)

    adj_i = jnp.dtype(cdt).itemsize
    seq_i = jnp.dtype(cdt).itemsize
    out_i = jnp.dtype(out_dtype).itemsize

    # Path choice against generation-aware VMEM headroom.
    fused_step_bytes = (2 * (N * N * adj_i + N * Cin * adj_i + N * Cp * out_i)
                        + (Cin * Cp + Cp) * 4)
    use_tiled = tile is not None or fused_step_bytes > vmem_lim // 2

    if not use_tiled:
        flops = 2 * B * N * Cin * Cp + 2 * B * N * N * Cp
        bytes_accessed = int(B * N * Cin * adj_i + B * N * N * adj_i
                             + (Cin + 1) * Cp * 4 + B * N * Cp * out_i)
        cost = pl.CostEstimate(flops=flops, transcendentals=0,
                               bytes_accessed=bytes_accessed)
        out_full = _gcn_fused_call(x_c, adj_c, w_t, b2, Cp, out_dtype, cost,
                                   vmem_lim)
        return out_full[..., :Cout] if Cp != Cout else out_full

    # ---------------- tiled (large-N / forced) path ----------------
    # Ragged N handled by zero-padding the node axis (exact: zero adj rows give
    # zero output rows that are sliced off; zero adj cols kill padded seq rows).
    if tile is not None:
        tm, tk = int(tile[0]), int(tile[1])
        assert tm % 8 == 0, "row tile must be a multiple of 8 sublanes"
        lcm = (tm * tk) // math.gcd(tm, tk)
        Np = _round_up(N, lcm)
        if tk % 128 != 0 and tk != Np:
            tk = Np  # keep the adj-tile lane dim legal (mult of 128 or full axis)
    else:
        Np = _round_up(N, 128)
        tm, tk = _pick_tiles(Np, Cp, adj_i, seq_i, out_i, vmem_lim // 2)

    if Np != N:
        x_c = jnp.pad(x_c, ((0, 0), (0, Np - N), (0, 0)))
        adj_c = jnp.pad(adj_c, ((0, 0), (0, Np - N), (0, Np - N)))

    # --- hoisted per-node linear: seq_fts = x @ w + b (tiny separate kernel) ---
    x_flat = x_c.reshape(B * Np, Cin)
    tr = tm
    for cand in (1024, 512, 256, 128):
        if cand > tr and (B * Np) % cand == 0:
            tr = cand
            break
    seq_cost = pl.CostEstimate(
        flops=2 * B * Np * Cin * Cp, transcendentals=0,
        bytes_accessed=int(B * Np * Cin * seq_i + (Cin + 1) * Cp * 4
                           + B * Np * Cp * seq_i))
    seq_flat = pl.pallas_call(
        _linear_kernel,
        out_shape=jax.ShapeDtypeStruct((B * Np, Cp), cdt),
        grid_spec=pltpu.PrefetchScalarGridSpec(
            num_scalar_prefetch=0,
            grid=(B * Np // tr,),
            in_specs=[
                pl.BlockSpec((tr, Cin), lambda r: (r, 0)),
                pl.BlockSpec((Cin, Cp), lambda r: (0, 0)),
                pl.BlockSpec((1, Cp), lambda r: (0, 0)),
            ],
            out_specs=pl.BlockSpec((tr, Cp), lambda r: (r, 0)),
        ),
        compiler_params=pltpu.CompilerParams(
            dimension_semantics=("parallel",),
            vmem_limit_bytes=vmem_lim,
        ),
        cost_estimate=seq_cost,
    )(x_flat, w_t, b2)
    seq = seq_flat.reshape(B, Np, Cp)

    # --- tiled aggregation: out = adj @ seq, k innermost (reduction) ---
    # MXU note: with Cp=128 the second matmul fills half the 256-wide MXU on
    # v6e/v7x; this kernel is HBM-bound on adj traffic, so tk>=512 keeps the
    # systolic array busy and no further action is needed.
    n_row_tiles = Np // tm
    agg_cost = pl.CostEstimate(
        flops=2 * B * Np * Np * Cp, transcendentals=0,
        bytes_accessed=int(B * Np * Np * adj_i
                           + n_row_tiles * B * Np * Cp * seq_i
                           + B * Np * Cp * out_i))

    inplace = jnp.dtype(out_dtype) == jnp.float32
    kernel = _agg_tiled_inplace_kernel if inplace else _agg_tiled_scratch_kernel
    scratch = [] if inplace else [pltpu.VMEM((tm, Cp), jnp.float32)]

    out_full = pl.pallas_call(
        kernel,
        out_shape=jax.ShapeDtypeStruct((B, Np, Cp), out_dtype),
        grid_spec=pltpu.PrefetchScalarGridSpec(
            num_scalar_prefetch=0,
            grid=(B, Np // tm, Np // tk),
            in_specs=[
                pl.BlockSpec((pl.Squeezed(), tm, tk), lambda b, i, k: (b, i, k)),
                pl.BlockSpec((pl.Squeezed(), tk, Cp), lambda b, i, k: (b, k, 0)),
            ],
            out_specs=pl.BlockSpec((pl.Squeezed(), tm, Cp),
                                   lambda b, i, k: (b, i, 0)),
            scratch_shapes=scratch,
        ),
        compiler_params=pltpu.CompilerParams(
            dimension_semantics=("parallel", "parallel", "arbitrary"),
            vmem_limit_bytes=vmem_lim,
        ),
        cost_estimate=agg_cost,
    )(adj_c, seq)

    if Np != N or Cp != Cout:
        out_full = out_full[:, :N, :Cout]
    return out_full


if __name__ == "__main__":
    # Small shapes consistent with the module: batch=2, nodes=16, input_dim=8,
    # output_dim=32.
    B, N, Cin, Cout = 2, 16, 8, 32

    key = jax.random.PRNGKey(0)
    kx, kadj, kw, kb = jax.random.split(key, 4)

    x = jax.random.normal(kx, (B, N, Cin), dtype=jnp.float32)
    adj = jax.random.uniform(kadj, (B, N, N), dtype=jnp.float32)

    # Conv1d-style init: U(-1/sqrt(fan_in), 1/sqrt(fan_in)).
    bound = 1.0 / (Cin ** 0.5)
    weight = jax.random.uniform(kw, (Cout, Cin), minval=-bound, maxval=bound,
                                dtype=jnp.float32)
    bias = jax.random.uniform(kb, (Cout,), minval=-bound, maxval=bound,
                              dtype=jnp.float32)

    # Pure-JAX reference of the same semantics.
    ref = jnp.einsum("bnm,bmo->bno", adj,
                     jnp.einsum("bni,oi->bno", x, weight) + bias)

    # 1) Fused per-batch path (f32 MXU operands) — primary correctness check.
    out = jax.block_until_ready(gcn_forward(x, adj, weight, bias))
    assert out.shape == (B, N, Cout)
    assert jnp.allclose(out, ref, atol=1e-4, rtol=1e-4)

    # 2) Tiled scalability path (hoisted linear + tiled adj@seq), small tiles.
    out_tiled = jax.block_until_ready(
        gcn_forward(x, adj, weight, bias, tile=(8, 16)))
    assert out_tiled.shape == (B, N, Cout)
    assert jnp.allclose(out_tiled, ref, atol=1e-4, rtol=1e-4)

    # 3) bf16 MXU-operand fast path (operands cast in the wrapper), f32 acc.
    out_bf16 = jax.block_until_ready(
        gcn_forward(x, adj, weight, bias, compute_dtype=jnp.bfloat16))
    assert out_bf16.shape == (B, N, Cout)
    assert jnp.allclose(out_bf16, ref, atol=6e-2, rtol=6e-2)

    print("KERNEL_OK")
</pallas_src>

<mosaic_0001>
module attributes {stable_mosaic.version = 11 : i64} {
  func.func @_gcn_fused_kernel(%arg0: i32, %arg1: memref<1x16x8xf32, #tpu.memory_space<vmem>>, %arg2: memref<1x16x16xf32, #tpu.memory_space<vmem>>, %arg3: memref<8x32xf32, #tpu.memory_space<vmem>>, %arg4: memref<1x32xf32, #tpu.memory_space<vmem>>, %arg5: memref<1x16x32xf32, #tpu.memory_space<vmem>>) attributes {dimension_semantics = [#tpu.dimension_semantics<parallel>], iteration_bounds = array<i64: 2>, scalar_prefetch = 0 : i64, scratch_operands = 0 : i64, tpu.core_type = #tpu.core_type<tc>, window_params = [{transform_indices = @transform_0, window_bounds = array<i64: 1, 16, 8>}, {transform_indices = @transform_1, window_bounds = array<i64: 1, 16, 16>}, {pipeline_mode = #tpu.pipeline_mode<synchronous>, transform_indices = @transform_2, window_bounds = array<i64: 8, 32>}, {pipeline_mode = #tpu.pipeline_mode<synchronous>, transform_indices = @transform_3, window_bounds = array<i64: 1, 32>}, {transform_indices = @transform_4, window_bounds = array<i64: 1, 16, 32>}]} {
    %c0 = arith.constant 0 : index
    %c0_0 = arith.constant 0 : index
    %c0_1 = arith.constant 0 : index
    %0 = vector.load %arg1[%c0, %c0_0, %c0_1] : memref<1x16x8xf32, #tpu.memory_space<vmem>>, vector<1x16x8xf32>
    %1 = vector.shape_cast %0 : vector<1x16x8xf32> to vector<16x8xf32>
    %c0_2 = arith.constant 0 : index
    %c0_3 = arith.constant 0 : index
    %2 = vector.load %arg3[%c0_2, %c0_3] : memref<8x32xf32, #tpu.memory_space<vmem>>, vector<8x32xf32>
    %cst = arith.constant dense<0.000000e+00> : vector<16x32xf32>
    %3 = tpu.matmul %1, %2, %cst {dimension_numbers = #tpu.dot_dimension_numbers<[1], [0], [0], [1], [0, 0, 1, 1], [], []>} : vector<16x8xf32>, vector<8x32xf32>, vector<16x32xf32> -> vector<16x32xf32>
    %c0_4 = arith.constant 0 : index
    %c0_5 = arith.constant 0 : index
    %4 = vector.load %arg4[%c0_4, %c0_5] : memref<1x32xf32, #tpu.memory_space<vmem>>, vector<1x32xf32>
    %5 = vector.broadcast %4 : vector<1x32xf32> to vector<16x32xf32>
    %6 = arith.addf %3, %5 : vector<16x32xf32>
    %c0_6 = arith.constant 0 : index
    %c0_7 = arith.constant 0 : index
    %c0_8 = arith.constant 0 : index
    %7 = vector.load %arg2[%c0_6, %c0_7, %c0_8] : memref<1x16x16xf32, #tpu.memory_space<vmem>>, vector<1x16x16xf32>
    %8 = vector.shape_cast %7 : vector<1x16x16xf32> to vector<16x16xf32>
    %cst_9 = arith.constant dense<0.000000e+00> : vector<16x32xf32>
    %9 = tpu.matmul %8, %6, %cst_9 {dimension_numbers = #tpu.dot_dimension_numbers<[1], [0], [0], [1], [0, 0, 1, 1], [], []>} : vector<16x16xf32>, vector<16x32xf32>, vector<16x32xf32> -> vector<16x32xf32>
    %c0_10 = arith.constant 0 : index
    %c0_11 = arith.constant 0 : index
    %c0_12 = arith.constant 0 : index
    %10 = vector.load %arg5[%c0_10, %c0_11, %c0_12] : memref<1x16x32xf32, #tpu.memory_space<vmem>>, vector<1x16x32xf32>
    %11 = vector.shape_cast %10 : vector<1x16x32xf32> to vector<16x32xf32>
    %12 = vector.shape_cast %9 : vector<16x32xf32> to vector<1x16x32xf32>
    tpu.vector_store %arg5[%c0_10, %c0_11, %c0_12], %12 {strides = array<i32>} : memref<1x16x32xf32, #tpu.memory_space<vmem>>, vector<1x16x32xf32>,
    return
  }
  func.func @transform_0(%arg0: i32) -> (i32, i32, i32) {
    %c0_i32 = arith.constant 0 : i32
    %c0_i32_0 = arith.constant 0 : i32
    %c0_i32_1 = arith.constant 0 : i32
    return %arg0, %c0_i32, %c0_i32_0 : i32, i32, i32
  }
  func.func @transform_1(%arg0: i32) -> (i32, i32, i32) {
    %c0_i32 = arith.constant 0 : i32
    %c0_i32_0 = arith.constant 0 : i32
    %c0_i32_1 = arith.constant 0 : i32
    return %arg0, %c0_i32, %c0_i32_0 : i32, i32, i32
  }
  func.func @transform_2(%arg0: i32) -> (i32, i32) {
    %c0_i32 = arith.constant 0 : i32
    %c0_i32_0 = arith.constant 0 : i32
    %c0_i32_1 = arith.constant 0 : i32
    return %c0_i32, %c0_i32_0 : i32, i32
  }
  func.func @transform_3(%arg0: i32) -> (i32, i32) {
    %c0_i32 = arith.constant 0 : i32
    %c0_i32_0 = arith.constant 0 : i32
    %c0_i32_1 = arith.constant 0 : i32
    return %c0_i32, %c0_i32_0 : i32, i32
  }
  func.func @transform_4(%arg0: i32) -> (i32, i32, i32) {
    %c0_i32 = arith.constant 0 : i32
    %c0_i32_0 = arith.constant 0 : i32
    %c0_i32_1 = arith.constant 0 : i32
    return %arg0, %c0_i32, %c0_i32_0 : i32, i32, i32
  }
}

</mosaic_0001>

<llo_original>
// kernel: tpu_custom_call.1
$region0: #{tpu_custom_call.1}
  #allocation0 [shape = 'u32[]', space=smem, size = 0x4, offset = 0x4, fixed_abs, tag = 'smem constant byte address 0x4 - core index']
  #allocation1 [shape = 'u32[144,128]{1,0:T(1,128)}', space=vmem, size = 0x12000, scoped, tag = 'internal scratch']
  %s0 = inlined_call_operand.vmem [shape: f32[2,16,8], index: 0, kind: input, shape index: {}]
  %s1 = inlined_call_operand.vmem [shape: f32[2,16,16], index: 1, kind: input, shape index: {}]
  %s2 = inlined_call_operand.vmem [shape: f32[8,32], index: 2, kind: input, shape index: {}]
  %s3 = inlined_call_operand.vmem [shape: f32[1,32], index: 3, kind: input, shape index: {}]
  %s4 = inlined_call_operand.hbm [shape: f32[2,16,32], index: 4, kind: output, shape index: {}]
  %s5 = sld [smem:[#allocation0]]
  $region49: #{tpu_custom_call.1} parent=0
    _
  %s7 = ssub.s32 1, %s5
  %s8 = scalar_select 0, %s7, %s5
  $region1: #{tpu_custom_call.1} parent=0
    #allocation2 [shape = 'u8[16384]{0}', space=vmem, size = 0x4000, scoped, tag = 'output window, operand 0']
    #allocation3 [shape = 's32[2]{0}', space=sflag, size = 0x8, scoped, tag = 'scoped memory for tpu_custom_call.1']
    %9 = vsyncpa [#allocation3], 0
    %s10 = scalar_lea.sflag [#allocation3], 1
    %11 = vsyncpa %s10, 0
    loop: start=0, step=1, limit=4
    $region2: #{tpu_custom_call.1} parent=1 // loop_pre_header
      _
    $region3: #{tpu_custom_call.1} parent=1 // loop_header
      %s13 = sphi 0, %s17
      %p14 = scmp.ge.s32.totalorder %s13, 4
      %s23 = sphi 0, %s25
      %s26 = sphi 0, %s23
      %s27 = sphi 0, %s26
      %s43 = sphi 0, %s27
      %s49 = sphi 0, %s51
      %s52 = sphi 0, %s49
      %s53 = sphi 0, %s52
      %s69 = sphi 0, %s53
      %s73 = sphi 0, %s73
      %s75 = sphi 0, %s73
      %s76 = sphi 0, %s75
      %s90 = sphi 0, %s76
      %s94 = sphi 0, %s94
      %s96 = sphi 0, %s94
      %s97 = sphi 0, %s96
      %s111 = sphi 0, %s97
      %s117 = sphi 0, %s119
      %s120 = sphi 0, %s117
      %s121 = sphi 0, %s120
      %s137 = sphi 0, %s121
    $region4: #{tpu_custom_call.1} parent=1 // loop_header_branch
      %16 = sbr.rel (%p14) target = $region8
    $region5: #{tpu_custom_call.1} parent=1 // loop_body
      %s18 = ssub.s32 %s13, 1
      %s19 = ssub.s32 %s13, 2
      %s20 = sadd.s32 %s13, 1
      %s21 = ssub.s32 %s13, %s20
      %p22 = scmp.eq.s32.totalorder %s21, 0
      %s24 = sadd.s32 %s23, 1
      %s25 = scalar_select %p22, %s23, %s24
      %p28 = pneg %p22
      %p29 = scmp.eq.s32.totalorder %s13, 1
      %p30 = por %p28, %p29
      %p31 = scmp.ne.s32.totalorder %s23, %s26
      %p32 = scmp.eq.s32.totalorder %s13, 0
      %p33 = por %p31, %p32
      %p34 = scmp.ne.s32.totalorder %s23, %s26
      %p35 = scmp.eq.s32.totalorder %s18, 1
      %p36 = por %p34, %p35
      %p37 = scmp.ne.s32.totalorder %s26, %s27
      %p38 = scmp.eq.s32.totalorder %s18, 0
      %p39 = por %p37, %p38
      %p40 = scmp.ne.s32.totalorder %s26, %s27
      %p41 = scmp.eq.s32.totalorder %s19, 1
      %p42 = por %p40, %p41
      %p44 = scmp.ne.s32.totalorder %s27, %s43
      %p45 = scmp.eq.s32.totalorder %s19, 0
      %p46 = por %p44, %p45
      %s47 = ssub.s32 %s13, %s20
      %p48 = scmp.eq.s32.totalorder %s47, 0
      %s50 = sadd.s32 %s49, 1
      %s51 = scalar_select %p48, %s49, %s50
      %p54 = pneg %p48
      %p55 = scmp.eq.s32.totalorder %s13, 1
      %p56 = por %p54, %p55
      %p57 = scmp.ne.s32.totalorder %s49, %s52
      %p58 = scmp.eq.s32.totalorder %s13, 0
      %p59 = por %p57, %p58
      %p60 = scmp.ne.s32.totalorder %s49, %s52
      %p61 = scmp.eq.s32.totalorder %s18, 1
      %p62 = por %p60, %p61
      %p63 = scmp.ne.s32.totalorder %s52, %s53
      %p64 = scmp.eq.s32.totalorder %s18, 0
      %p65 = por %p63, %p64
      %p66 = scmp.ne.s32.totalorder %s52, %s53
      %p67 = scmp.eq.s32.totalorder %s19, 1
      %p68 = por %p66, %p67
      %p70 = scmp.ne.s32.totalorder %s53, %s69
      %p71 = scmp.eq.s32.totalorder %s19, 0
      %p72 = por %p70, %p71
      %s74 = sadd.s32 %s73, 1
      %p77 = scmp.eq.s32.totalorder %s13, 1
      %p78 = scmp.ne.s32.totalorder %s73, %s75
      %p79 = scmp.eq.s32.totalorder %s13, 0
      %p80 = por %p78, %p79
      %p81 = scmp.ne.s32.totalorder %s73, %s75
      %p82 = scmp.eq.s32.totalorder %s18, 1
      %p83 = por %p81, %p82
      %p84 = scmp.ne.s32.totalorder %s75, %s76
      %p85 = scmp.eq.s32.totalorder %s18, 0
      %p86 = por %p84, %p85
      %p87 = scmp.ne.s32.totalorder %s75, %s76
      %p88 = scmp.eq.s32.totalorder %s19, 1
      %p89 = por %p87, %p88
      %p91 = scmp.ne.s32.totalorder %s76, %s90
      %p92 = scmp.eq.s32.totalorder %s19, 0
      %p93 = por %p91, %p92
      %s95 = sadd.s32 %s94, 1
      %p98 = scmp.eq.s32.totalorder %s13, 1
      %p99 = scmp.ne.s32.totalorder %s94, %s96
      %p100 = scmp.eq.s32.totalorder %s13, 0
      %p101 = por %p99, %p100
      %p102 = scmp.ne.s32.totalorder %s94, %s96
      %p103 = scmp.eq.s32.totalorder %s18, 1
      %p104 = por %p102, %p103
      %p105 = scmp.ne.s32.totalorder %s96, %s97
      %p106 = scmp.eq.s32.totalorder %s18, 0
      %p107 = por %p105, %p106
      %p108 = scmp.ne.s32.totalorder %s96, %s97
      %p109 = scmp.eq.s32.totalorder %s19, 1
      %p110 = por %p108, %p109
      %p112 = scmp.ne.s32.totalorder %s97, %s111
      %p113 = scmp.eq.s32.totalorder %s19, 0
      %p114 = por %p112, %p113
      %s115 = ssub.s32 %s13, %s20
      %p116 = scmp.eq.s32.totalorder %s115, 0
      %s118 = sadd.s32 %s117, 1
      %s119 = scalar_select %p116, %s117, %s118
      %p122 = pneg %p116
      %p123 = scmp.eq.s32.totalorder %s13, 1
      %p124 = por %p122, %p123
      %p125 = scmp.ne.s32.totalorder %s117, %s120
      %p126 = scmp.eq.s32.totalorder %s13, 0
      %p127 = por %p125, %p126
      %p128 = scmp.ne.s32.totalorder %s117, %s120
      %p129 = scmp.eq.s32.totalorder %s18, 1
      %p130 = por %p128, %p129
      %p131 = scmp.ne.s32.totalorder %s120, %s121
      %p132 = scmp.eq.s32.totalorder %s18, 0
      %p133 = por %p131, %p132
      %p134 = scmp.ne.s32.totalorder %s120, %s121
      %p135 = scmp.eq.s32.totalorder %s19, 1
      %p136 = por %p134, %p135
      %p138 = scmp.ne.s32.totalorder %s121, %s137
      %p139 = scmp.eq.s32.totalorder %s19, 0
      %p140 = por %p138, %p139
      %p141 = scmp.le.s32.totalorder 1, %s13
      %p142 = scmp.lt.s32.totalorder %s13, 3
      %p143 = pnand %p141, %p142
      %p144 = pneg %p143
      // Predicated region
      $region9: #{tpu_custom_call.1} parent=5 // pred_check
        _
      $region10: #{tpu_custom_call.1} parent=5 // pred_check_branch
        %146 = sbr.rel (%p143) target = $region12
      $region11: #{tpu_custom_call.1} parent=5 // pred_region
        %s147 = ssub.s32 %s13, 1
        // Predicated region
        $region13: #{tpu_custom_call.1} parent=11 // pred_check
          %p148 = pneg %p86
        $region14: #{tpu_custom_call.1} parent=11 // pred_check_branch
          %150 = sbr.rel (%p148) target = $region16
        $region15: #{tpu_custom_call.1} parent=11 // pred_region
          _
        $region16: #{tpu_custom_call.1} parent=11 // pred_fallthru
          _
        // Predicated region
        $region17: #{tpu_custom_call.1} parent=11 // pred_check
          %p151 = pneg %p107
        $region18: #{tpu_custom_call.1} parent=11 // pred_check_branch
          %153 = sbr.rel (%p151) target = $region20
        $region19: #{tpu_custom_call.1} parent=11 // pred_region
          _
        $region20: #{tpu_custom_call.1} parent=11 // pred_fallthru
          _
      $region12: #{tpu_custom_call.1} parent=5 // pred_fallthru
        _
      %p154 = scmp.lt.s32.totalorder %s13, 2
      // Predicated region
      $region21: #{tpu_custom_call.1} parent=5 // pred_check
        %p155 = pneg %p154
      $region22: #{tpu_custom_call.1} parent=5 // pred_check_branch
        %157 = sbr.rel (%p155) target = $region24
      $region23: #{tpu_custom_call.1} parent=5 // pred_region
        // Predicated region
        $region25: #{tpu_custom_call.1} parent=23 // pred_check
          %p158 = pneg %p33
        $region26: #{tpu_custom_call.1} parent=23 // pred_check_branch
          %160 = sbr.rel (%p158) target = $region28
        $region27: #{tpu_custom_call.1} parent=23 // pred_region
          %p161 = scmp.lt.s32.totalorder %s13, 1
          %s162 = scalar_select %p161, %s13, 1
          %s163 = smul.addr %s162, 2
          %s164 = smul.addr %s163, 8
          %s165 = scalar_lea.vmem %s0, %s164
        $region28: #{tpu_custom_call.1} parent=23 // pred_fallthru
          _
        // Predicated region
        $region29: #{tpu_custom_call.1} parent=23 // pred_check
          %p166 = pneg %p59
        $region30: #{tpu_custom_call.1} parent=23 // pred_check_branch
          %168 = sbr.rel (%p166) target = $region32
        $region31: #{tpu_custom_call.1} parent=23 // pred_region
          %p169 = scmp.lt.s32.totalorder %s13, 1
          %s170 = scalar_select %p169, %s13, 1
          %s171 = smul.addr %s170, 2
          %s172 = smul.addr %s171, 8
          %s173 = scalar_lea.vmem %s1, %s172
        $region32: #{tpu_custom_call.1} parent=23 // pred_fallthru
          _
      $region24: #{tpu_custom_call.1} parent=5 // pred_fallthru
        _
      %p174 = scmp.le.s32.totalorder 1, %s13
      %p175 = scmp.lt.s32.totalorder %s13, 3
      %p176 = pnand %p174, %p175
      %p177 = pneg %p176
      // Predicated region
      $region33: #{tpu_custom_call.1} parent=5 // pred_check
        _
      $region34: #{tpu_custom_call.1} parent=5 // pred_check_branch
        %179 = sbr.rel (%p176) target = $region36
      $region35: #{tpu_custom_call.1} parent=5 // pred_region
        %s180 = ssub.s32 %s13, 1
        %p181 = scmp.lt.s32.totalorder %s18, 1
        %s182 = scalar_select %p181, %s18, 1
        %s183 = smul.addr %s182, 2
        %s184 = smul.addr %s183, 8
        %s185 = scalar_lea.vmem %s0, %s184
        %p186 = pneg %p39
        %p187 = pneg %p36
        %p188 = scmp.lt.s32.totalorder %s18, 1
        %s189 = scalar_select %p188, %s18, 1
        %s190 = smul.addr %s189, 2
        %s191 = smul.addr %s190, 8
        %s192 = scalar_lea.vmem %s1, %s191
        %p193 = pneg %p65
        %p194 = pneg %p62
        %p195 = pneg %p86
        %p196 = pneg %p83
        %p197 = pneg %p107
        %p198 = pneg %p104
        %p199 = pneg %p133
        %p200 = pneg %p130
        %s201 = sand.u32 %s120, 1
        %s202 = scalar_lea.sflag [#allocation3], %s201
        %s203 = sand.u32 %s120, 1
        %s204 = smul.addr %s203, 16
        %s205 = scalar_lea.vmem [#allocation2], %s204
        %p206 = scmp.lt.s32.totalorder %s18, 1
        %s207 = scalar_select %p206, %s18, 1
        %s208 = smul.addr %s207, 2
        %s209 = smul.addr %s208, 8
        %s210 = scalar_lea.vmem %s0, %s209
        %p211 = scmp.lt.s32.totalorder %s18, 1
        %s212 = scalar_select %p211, %s18, 1
        %s213 = smul.addr %s212, 2
        %s214 = smul.addr %s213, 8
        %s215 = scalar_lea.vmem %s1, %s214
        %v216 = vld [vmem:[%s210] sm:$0xff]
        %v217 = vld [vmem:[%s210 + $0x8] sm:$0xff]
        %v218 = vld [vmem:[%s2] sm:$0xff]
        %v219 = vld [vmem:[%s3] sm:$0x1]
        %v221 = vlaneseq
        %v222 = vshrl.u32 %v221, 7
        %v223 = vsub.s32 0, %v222
        %v224 = vrot.slane %v219, %v223
        %vm226 = vcmask 64512
        %v228 = vsel %vm226, %v216, 0
        %v231 = vsel %vm226, %v217, 0
        %233 = vmatprep.subr.mxu0 0.0
        %234 = vmatpush1.msra.mxu0 %v218
        %235 = vmatprep.subr.mxu0 0.0
        %236 = vmatpush1.msra.mxu0 0.0
        %237 = vmatprep.subr.mxu0 0.0
        %238 = vmatpush1.msra.mxu0 0.0
        %239 = vmatprep.subr.mxu0 0.0
        %240 = vmatpush1.msra.mxu0 0.0
        %241 = vmatprep.subr.mxu0 0.0
        %242 = vmatpush1.msra.mxu0 0.0
        %243 = vmatprep.subr.mxu0 0.0
        %244 = vmatpush1.msra.mxu0 0.0
        %245 = vmatprep.subr.mxu0 0.0
        %246 = vmatpush1.msra.mxu0 0.0
        %247 = vmatprep.subr.mxu0 0.0
        %248 = vmatpush1.msra.mxu0 0.0
        %249 = vmatprep.subr.mxu0 0.0
        %250 = vmatpush1.msra.mxu0 0.0
        %251 = vmatprep.subr.mxu0 0.0
        %252 = vmatpush1.msra.mxu0 0.0
        %253 = vmatprep.subr.mxu0 0.0
        %254 = vmatpush1.msra.mxu0 0.0
        %255 = vmatprep.subr.mxu0 0.0
        %256 = vmatpush1.msra.mxu0 0.0
        %257 = vmatprep.subr.mxu0 0.0
        %258 = vmatpush1.msra.mxu0 0.0
        %259 = vmatprep.subr.mxu0 0.0
        %260 = vmatpush1.msra.mxu0 0.0
        %261 = vmatprep.subr.mxu0 0.0
        %262 = vmatpush1.msra.mxu0 0.0
        %263 = vmatprep.subr.mxu0 0.0
        %264 = vmatpush1.msra.mxu0 0.0
        %265 = vmatprep.subr.mxu0 0.0
        %266 = vmatpush1.msra.mxu0 0.0
        %267 = vmatprep.subr.mxu0 0.0
        %268 = vmatpush1.msra.mxu0 0.0
        %269 = vmatprep.subr.mxu0 0.0
        %270 = vmatpush1.msra.mxu0 0.0
        %271 = vmatprep.subr.mxu0 0.0
        %272 = vmatpush1.msra.mxu0 0.0
        %273 = vmatprep.subr.mxu0 0.0
        %274 = vmatpush1.msra.mxu0 0.0
        %275 = vmatprep.subr.mxu0 0.0
        %276 = vmatpush1.msra.mxu0 0.0
        %277 = vmatprep.subr.mxu0 0.0
        %278 = vmatpush1.msra.mxu0 0.0
        %279 = vmatprep.subr.mxu0 0.0
        %280 = vmatpush1.msra.mxu0 0.0
        %281 = vmatprep.subr.mxu0 0.0
        %282 = vmatpush1.msra.mxu0 0.0
        %283 = vmatprep.subr.mxu0 0.0
        %284 = vmatpush1.msra.mxu0 0.0
        %285 = vmatprep.subr.mxu0 0.0
        %286 = vmatpush1.msra.mxu0 0.0
        %287 = vmatprep.subr.mxu0 0.0
        %288 = vmatpush1.msra.mxu0 0.0
        %289 = vmatprep.subr.mxu0 0.0
        %290 = vmatpush1.msra.mxu0 0.0
        %291 = vmatprep.subr.mxu0 0.0
        %292 = vmatpush1.msra.mxu0 0.0
        %293 = vmatprep.subr.mxu0 0.0
        %294 = vmatpush1.msra.mxu0 0.0
        %295 = vmatprep.subr.mxu0 0.0
        %296 = vmatpush1.msra.mxu0 0.0
        %297 = vmatprep.mubr.f32.mxu0 0.0
        %298 = vmatmul.mubr.f32.gmra.mrb[0].mxu0 %v228
        %v299 = vpop.f32.mrb[0].mxu0
        %v300 = vadd.f32 %v224, %v299
        %v301 = vpop.f32.mrb[0].mxu0
        %302 = vmatprep.mubr.f32.mxu0 0.0
        %303 = vmatmul.mubr.f32.gmra.mrb[0].mxu0 %v231
        %v304 = vpop.f32.mrb[0].mxu0
        %v305 = vadd.f32 %v224, %v304
        %v306 = vpop.f32.mrb[0].mxu0
        %307 = vdwg.mxu0
        %v308 = vld [vmem:[%s215] sm:$0xff]
        %v309 = vld [vmem:[%s215 + $0x8] sm:$0xff]
        %vm310 = vcmask 130048
        %v312 = vsel %vm310, %v308, 0
        %v315 = vsel %vm310, %v309, 0
        %317 = vmatprep.subr.mxu0 0.0
        %318 = vmatpush1.msra.mxu0 %v300
        %319 = vmatprep.subr.mxu0 0.0
        %320 = vmatpush1.msra.mxu0 %v305
        %321 = vmatprep.subr.mxu0 0.0
        %322 = vmatpush1.msra.mxu0 0.0
        %323 = vmatprep.subr.mxu0 0.0
        %324 = vmatpush1.msra.mxu0 0.0
        %325 = vmatprep.subr.mxu0 0.0
        %326 = vmatpush1.msra.mxu0 0.0
        %327 = vmatprep.subr.mxu0 0.0
        %328 = vmatpush1.msra.mxu0 0.0
        %329 = vmatprep.subr.mxu0 0.0
        %330 = vmatpush1.msra.mxu0 0.0
        %331 = vmatprep.subr.mxu0 0.0
        %332 = vmatpush1.msra.mxu0 0.0
        %333 = vmatprep.subr.mxu0 0.0
        %334 = vmatpush1.msra.mxu0 0.0
        %335 = vmatprep.subr.mxu0 0.0
        %336 = vmatpush1.msra.mxu0 0.0
        %337 = vmatprep.subr.mxu0 0.0
        %338 = vmatpush1.msra.mxu0 0.0
        %339 = vmatprep.subr.mxu0 0.0
        %340 = vmatpush1.msra.mxu0 0.0
        %341 = vmatprep.subr.mxu0 0.0
        %342 = vmatpush1.msra.mxu0 0.0
        %343 = vmatprep.subr.mxu0 0.0
        %344 = vmatpush1.msra.mxu0 0.0
        %345 = vmatprep.subr.mxu0 0.0
        %346 = vmatpush1.msra.mxu0 0.0
        %347 = vmatprep.subr.mxu0 0.0
        %348 = vmatpush1.msra.mxu0 0.0
        %349 = vmatprep.subr.mxu0 0.0
        %350 = vmatpush1.msra.mxu0 0.0
        %351 = vmatprep.subr.mxu0 0.0
        %352 = vmatpush1.msra.mxu0 0.0
        %353 = vmatprep.subr.mxu0 0.0
        %354 = vmatpush1.msra.mxu0 0.0
        %355 = vmatprep.subr.mxu0 0.0
        %356 = vmatpush1.msra.mxu0 0.0
        %357 = vmatprep.subr.mxu0 0.0
        %358 = vmatpush1.msra.mxu0 0.0
        %359 = vmatprep.subr.mxu0 0.0
        %360 = vmatpush1.msra.mxu0 0.0
        %361 = vmatprep.subr.mxu0 0.0
        %362 = vmatpush1.msra.mxu0 0.0
        %363 = vmatprep.subr.mxu0 0.0
        %364 = vmatpush1.msra.mxu0 0.0
        %365 = vmatprep.subr.mxu0 0.0
        %366 = vmatpush1.msra.mxu0 0.0
        %367 = vmatprep.subr.mxu0 0.0
        %368 = vmatpush1.msra.mxu0 0.0
        %369 = vmatprep.subr.mxu0 0.0
        %370 = vmatpush1.msra.mxu0 0.0
        %371 = vmatprep.subr.mxu0 0.0
        %372 = vmatpush1.msra.mxu0 0.0
        %373 = vmatprep.subr.mxu0 0.0
        %374 = vmatpush1.msra.mxu0 0.0
        %375 = vmatprep.subr.mxu0 0.0
        %376 = vmatpush1.msra.mxu0 0.0
        %377 = vmatprep.subr.mxu0 0.0
        %378 = vmatpush1.msra.mxu0 0.0
        %379 = vmatprep.subr.mxu0 0.0
        %380 = vmatpush1.msra.mxu0 0.0
        %381 = vmatprep.mubr.f32.mxu0 0.0
        %382 = vmatmul.mubr.f32.gmra.mrb[0].mxu0 %v312
        %v383 = vpop.f32.mrb[0].mxu0
        %v384 = vadd.f32 0.0, %v383
        %v385 = vpop.f32.mrb[0].mxu0
        %386 = vmatprep.mubr.f32.mxu0 0.0
        %387 = vmatmul.mubr.f32.gmra.mrb[0].mxu0 %v315
        %v388 = vpop.f32.mrb[0].mxu0
        %v389 = vadd.f32 0.0, %v388
        %v390 = vpop.f32.mrb[0].mxu0
        %391 = vdwg.mxu0
        %vm392 = vcmask 261120
        %393 = vst.msk [vmem:[%s205] sm:$0xff] %vm392, %v384
        %394 = vst.msk [vmem:[%s205 + $0x8] sm:$0xff] %vm392, %v389
        %s395 = sand.u32 %s120, 1
        %s396 = scalar_lea.sflag [#allocation3], %s395
        %s397 = sand.u32 %s120, 1
        %s398 = smul.addr %s397, 16
        %s399 = scalar_lea.vmem [#allocation2], %s398
        // Predicated region
        $region37: #{tpu_custom_call.1} parent=35 // pred_check
          %p400 = pneg %p130
        $region38: #{tpu_custom_call.1} parent=35 // pred_check_branch
          %402 = sbr.rel (%p400) target = $region40
        $region39: #{tpu_custom_call.1} parent=35 // pred_region
          %s404 = ssub.s32 256, 256
          %405 = vsyncadd %s396, %s404
          %s406 = smul.addr %s18, 2
          %s407 = smul.addr %s406, 128
          %s408 = scalar_lea.hbm %s4, %s407
          %s409 = sshll.u32 %s399, 4
          %s410 = int_to_ptr.vmem [resolvable:$true] %s409
          %415 = dma.vmem_to_hbm [thread:$0]  %s410, 256, %s408, %s396, 128, 128, 8
        $region40: #{tpu_custom_call.1} parent=35 // pred_fallthru
          _
      $region36: #{tpu_custom_call.1} parent=5 // pred_fallthru
        _
      %p416 = scmp.le.s32.totalorder 2, %s13
      // Predicated region
      $region41: #{tpu_custom_call.1} parent=5 // pred_check
        %p417 = pneg %p416
      $region42: #{tpu_custom_call.1} parent=5 // pred_check_branch
        %419 = sbr.rel (%p417) target = $region44
      $region43: #{tpu_custom_call.1} parent=5 // pred_region
        %s420 = ssub.s32 %s13, 2
        // Predicated region
        $region45: #{tpu_custom_call.1} parent=43 // pred_check
          %p421 = pneg %p136
        $region46: #{tpu_custom_call.1} parent=43 // pred_check_branch
          %423 = sbr.rel (%p421) target = $region48
        $region47: #{tpu_custom_call.1} parent=43 // pred_region
          %s424 = sand.u32 %s121, 1
          %s425 = scalar_lea.sflag [#allocation3], %s424
          %s426 = sand.u32 %s121, 1
          %s427 = smul.addr %s426, 16
          %s428 = scalar_lea.vmem [#allocation2], %s427
          %429 = dma.done %s425, 256
        $region48: #{tpu_custom_call.1} parent=43 // pred_fallthru
          _
      $region44: #{tpu_custom_call.1} parent=5 // pred_fallthru
        _
    $region6: #{tpu_custom_call.1} parent=1 // loop_footer
      %s17 = sadd.s32 1, %s13
    $region7: #{tpu_custom_call.1} parent=1 // loop_footer_branch
      %12 = sbr.rel target = $region3
    $region8: #{tpu_custom_call.1} parent=1 // loop_exit
      _
    %430 = vsyncpa [#allocation3], 1
    %s431 = scalar_lea.sflag [#allocation3], 1
    %432 = vsyncpa %s431, 1

</llo_original>
